<compile_context>
chip_gen: v5e
topology: v5e:2x2
jax: 0.10.0
libtpu: 0.0.40
codegen_flags: <defaults>
</compile_context>

<pallas_src>
import functools
import math

import jax
import jax.numpy as jnp
from jax.experimental import pallas as pl
from jax.experimental.pallas import tpu as pltpu

_NEG = -1e9  # finite large-negative mask value (avoids NaN on fully-masked rows)


# ----------------------------------------------------------------------------
# helpers
# ----------------------------------------------------------------------------
def _round_up(x, m):
    return ((x + m - 1) // m) * m


def _pick_tile(padded, pref, step):
    """Largest tile <= pref that divides `padded` (padded is a multiple of step)."""
    if padded <= pref:
        return padded
    t = pref
    while padded % t:
        t -= step
    return t


def _pad2d(x, rp, cp, dtype):
    r, c = x.shape
    x = x.astype(dtype)
    if (rp, cp) != (r, c):
        x = jnp.zeros((rp, cp), dtype).at[:r, :c].set(x)
    return x


# ----------------------------------------------------------------------------
# Pallas GEMM:  C = relu?(A @ B + bias [+ residual])   (bf16 MXU, f32 accum)
# ----------------------------------------------------------------------------
def _mm_kernel(*refs, relu, has_res):
    if has_res:
        a_ref, b_ref, bias_ref, res_ref, o_ref = refs
    else:
        a_ref, b_ref, bias_ref, o_ref = refs
        res_ref = None
    k = pl.program_id(2)

    @pl.when(k == 0)
    def _():
        o_ref[...] = jnp.zeros_like(o_ref)

    o_ref[...] += jnp.dot(a_ref[...], b_ref[...],
                          preferred_element_type=jnp.float32)

    @pl.when(k == pl.num_programs(2) - 1)
    def _():
        r = o_ref[...] + bias_ref[...]
        if has_res:
            r = r + res_ref[...]
        if relu:
            r = jnp.maximum(r, 0.0)
        o_ref[...] = r


@functools.partial(jax.jit, static_argnames=("relu",))
def pl_matmul(a, b, bias, res=None, relu=False):
    """A:(M,K) B:(K,N) bias:(N,) [res:(M,N)] -> (M,N) float32."""
    M, K = a.shape
    _, N = b.shape
    Mp = _round_up(max(M, 8), 8)
    Kp = _round_up(K, 128)
    if Kp >= 256:
        Kp = _round_up(Kp, 256)              # keep TK >= 256 (less output RMW per FLOP)
    Np = _round_up(N, 128)
    TM = _pick_tile(Mp, 256, 8)
    TK = _pick_tile(Kp, 512, 256) if Kp >= 256 else Kp
    TN = _pick_tile(Np, 512, 128)
    if Mp == TM and Np == TN and TN % 256 == 0:
        TN //= 2                              # expose >=2 parallel blocks (v7x dual TC)

    a = _pad2d(a, Mp, Kp, jnp.bfloat16)
    b = _pad2d(b, Kp, Np, jnp.bfloat16)
    bias2 = _pad2d(bias.reshape(1, N), 1, Np, jnp.float32)
    has_res = res is not None

    inputs = [a, b, bias2]
    in_specs = [pl.BlockSpec((TM, TK), lambda i, j, k: (i, k)),
                pl.BlockSpec((TK, TN), lambda i, j, k: (k, j)),
                pl.BlockSpec((1, TN), lambda i, j, k: (0, j))]
    if has_res:
        inputs.append(_pad2d(res, Mp, Np, jnp.float32))
        in_specs.append(pl.BlockSpec((TM, TN), lambda i, j, k: (i, j)))

    flops = 2 * Mp * Kp * Np
    bytes_acc = 2 * (Mp * Kp + Kp * Np) + 4 * Mp * Np * (2 if has_res else 1)

    out = pl.pallas_call(
        functools.partial(_mm_kernel, relu=relu, has_res=has_res),
        out_shape=jax.ShapeDtypeStruct((Mp, Np), jnp.float32),
        grid_spec=pltpu.PrefetchScalarGridSpec(
            num_scalar_prefetch=0,
            grid=(Mp // TM, Np // TN, Kp // TK),
            in_specs=in_specs,
            out_specs=pl.BlockSpec((TM, TN), lambda i, j, k: (i, j)),
        ),
        compiler_params=pltpu.CompilerParams(
            dimension_semantics=("parallel", "parallel", "arbitrary"),
            vmem_limit_bytes=32 * 1024 * 1024),
        cost_estimate=pl.CostEstimate(flops=flops, transcendentals=0,
                                      bytes_accessed=bytes_acc),
    )(*inputs)
    if (Mp, Np) != (M, N):
        out = out[:M, :N]
    return out


# ----------------------------------------------------------------------------
# Direct 3x3 / stride-1 / pad-1 conv (no im2col): 9 kernel offsets on the grid,
# each offset is a contiguous window of the flattened padded NHWC input.
# ----------------------------------------------------------------------------
def _conv3x3s1_kernel(x_ref, w_ref, b_ref, o_ref, *, mw, wp2, relu):
    kk = pl.program_id(1)

    @pl.when(kk == 0)
    def _():
        o_ref[...] = jnp.zeros_like(o_ref)

    off = (kk // 3) * wp2 + (kk % 3)
    a = x_ref[pl.ds(off, mw), :]                       # (H*(W+2), Cin) bf16
    o_ref[...] += jnp.dot(a, w_ref[...], preferred_element_type=jnp.float32)

    @pl.when(kk == pl.num_programs(1) - 1)
    def _():
        r = o_ref[...] + b_ref[...]
        if relu:
            r = jnp.maximum(r, 0.0)
        o_ref[...] = r


@functools.partial(jax.jit, static_argnames=("relu",))
def conv3x3_s1(x, w, b, relu=False):
    """x:(B,H,W,Cin) NHWC, w:(Cout,Cin,3,3), stride 1 / pad 1."""
    B, H, W_, Cin = x.shape
    Cout = w.shape[0]
    wp2 = W_ + 2
    mw = H * wp2
    # pad: 1 top / 2 bottom / 1 left / 1 right so every shifted window is in range
    xp = jnp.pad(x.astype(jnp.bfloat16), ((0, 0), (1, 2), (1, 1), (0, 0)))
    xflat = xp.reshape(B, (H + 3) * wp2, Cin)
    wk = jnp.transpose(w, (2, 3, 1, 0)).reshape(9, Cin, Cout).astype(jnp.bfloat16)
    bias2 = b.astype(jnp.float32).reshape(1, Cout)

    flops = 2 * B * 9 * mw * Cin * Cout
    bytes_acc = 2 * B * (H + 3) * wp2 * Cin + 2 * 9 * Cin * Cout + 4 * B * mw * Cout

    out = pl.pallas_call(
        functools.partial(_conv3x3s1_kernel, mw=mw, wp2=wp2, relu=relu),
        out_shape=jax.ShapeDtypeStruct((B, mw, Cout), jnp.float32),
        grid_spec=pltpu.PrefetchScalarGridSpec(
            num_scalar_prefetch=0,
            grid=(B, 9),
            in_specs=[
                pl.BlockSpec((None, (H + 3) * wp2, Cin), lambda bb, kk: (bb, 0, 0)),
                pl.BlockSpec((None, Cin, Cout), lambda bb, kk: (kk, 0, 0)),
                pl.BlockSpec((1, Cout), lambda bb, kk: (0, 0)),
            ],
            out_specs=pl.BlockSpec((None, mw, Cout), lambda bb, kk: (bb, 0, 0)),
        ),
        compiler_params=pltpu.CompilerParams(
            dimension_semantics=("parallel", "arbitrary"),
            vmem_limit_bytes=32 * 1024 * 1024),
        cost_estimate=pl.CostEstimate(flops=flops, transcendentals=0,
                                      bytes_accessed=bytes_acc),
    )(xflat, wk, bias2)
    # TODO(synk): tile the mw axis for very large images to bound in-kernel value size.
    return out.reshape(B, H, wp2, Cout)[:, :, :W_, :]   # drop the 2 junk columns


# ----------------------------------------------------------------------------
# Pallas attention (lane-dense padded head dim, in-kernel masks, VMEM-aware Bblk)
# ----------------------------------------------------------------------------
def _attn_kernel(q_ref, k_ref, v_ref, kpm_ref, o_ref, *, causal):
    q = q_ref[...]                                     # (B, L, Dp) bf16 (scale folded)
    k = k_ref[...]
    v = v_ref[...]
    s = jax.lax.dot_general(q, k, (((2,), (2,)), ((0,), (0,))),
                            preferred_element_type=jnp.float32)   # (B, L, S)
    s = s + kpm_ref[...]                               # (B, 1, S) additive pad mask
    if causal:
        L, S = s.shape[1], s.shape[2]
        row = jax.lax.broadcasted_iota(jnp.int32, (L, S), 0)
        col = jax.lax.broadcasted_iota(jnp.int32, (L, S), 1)
        s = jnp.where((col > row)[None, :, :], jnp.float32(_NEG), s)
    s = s - jnp.max(s, axis=-1, keepdims=True)
    p = jnp.exp(s)
    denom = jnp.sum(p, axis=-1, keepdims=True)
    p = p * pl.reciprocal(denom, approx=True)
    o = jax.lax.dot_general(p.astype(v.dtype), v, (((2,), (1,)), ((0,), (0,))),
                            preferred_element_type=jnp.float32)
    o_ref[...] = o
    # TODO(synk): for long S, flash-tile S (online softmax over S blocks) instead
    # of materializing the full (Bblk, L, S) score block.


@functools.partial(jax.jit, static_argnames=("causal",))
def pl_attention(q, k, v, kpm_add, causal=False):
    """q:(BH,L,Dp) k,v:(BH,S,Dp) bf16, kpm_add:(BH,S) additive f32 -> (BH,L,Dp) f32."""
    BH, L, Dp = q.shape
    S = k.shape[1]
    # per-(batch*head) VMEM cost (score f32 + q/k/v bf16 + out f32 + acc)
    per = 4 * L * S + 2 * L * Dp + 4 * S * Dp + 8 * L * Dp + 4 * S
    cap = max(1, min(8, (8 * 1024 * 1024) // max(per, 1)))
    if BH >= 2:
        cap = min(cap, BH // 2)       # >=2 parallel blocks for dual-TC chips (v7x)
    Bblk = 1
    for t in range(cap, 0, -1):
        if BH % t == 0:
            Bblk = t
            break
    kpm3 = kpm_add.astype(jnp.float32).reshape(BH, 1, S)

    flops = 4 * BH * L * S * Dp
    bytes_acc = 2 * (BH * L * Dp + 2 * BH * S * Dp) + 4 * (BH * L * Dp + BH * S)
    vmem = int(max(32 * 1024 * 1024, min(64 * 1024 * 1024, 4 * Bblk * per)))

    return pl.pallas_call(
        functools.partial(_attn_kernel, causal=causal),
        out_shape=jax.ShapeDtypeStruct((BH, L, Dp), jnp.float32),
        grid_spec=pltpu.PrefetchScalarGridSpec(
            num_scalar_prefetch=0,
            grid=(BH // Bblk,),
            in_specs=[
                pl.BlockSpec((Bblk, L, Dp), lambda b: (b, 0, 0)),
                pl.BlockSpec((Bblk, S, Dp), lambda b: (b, 0, 0)),
                pl.BlockSpec((Bblk, S, Dp), lambda b: (b, 0, 0)),
                pl.BlockSpec((Bblk, 1, S), lambda b: (b, 0, 0)),
            ],
            out_specs=pl.BlockSpec((Bblk, L, Dp), lambda b: (b, 0, 0)),
        ),
        compiler_params=pltpu.CompilerParams(
            dimension_semantics=("parallel",),
            vmem_limit_bytes=vmem),
        cost_estimate=pl.CostEstimate(flops=flops, transcendentals=BH * L * S,
                                      bytes_accessed=bytes_acc),
    )(q.astype(jnp.bfloat16), k.astype(jnp.bfloat16),
      v.astype(jnp.bfloat16), kpm3)


# ----------------------------------------------------------------------------
# Pallas layernorm (row-tiled, optional fused residual add) -- f32 math
# ----------------------------------------------------------------------------
def _ln_math(x, w, b):
    mu = jnp.mean(x, axis=-1, keepdims=True)
    xc = x - mu
    var = jnp.mean(xc * xc, axis=-1, keepdims=True)
    return xc * jax.lax.rsqrt(var + 1e-5) * w + b


def _ln_kernel(x_ref, w_ref, b_ref, o_ref):
    o_ref[...] = _ln_math(x_ref[...], w_ref[...], b_ref[...])


def _ln_res_kernel(x_ref, r_ref, w_ref, b_ref, o_ref):
    o_ref[...] = _ln_math(x_ref[...] + r_ref[...], w_ref[...], b_ref[...])


@jax.jit
def pl_layernorm(x, w, b):
    R, D = x.shape
    Rp = _round_up(max(R, 8), 8)
    TR = _pick_tile(Rp, 512, 8)
    x = _pad2d(x, Rp, D, jnp.float32)
    out = pl.pallas_call(
        _ln_kernel,
        out_shape=jax.ShapeDtypeStruct((Rp, D), jnp.float32),
        grid_spec=pltpu.PrefetchScalarGridSpec(
            num_scalar_prefetch=0,
            grid=(Rp // TR,),
            in_specs=[pl.BlockSpec((TR, D), lambda i: (i, 0)),
                      pl.BlockSpec((1, D), lambda i: (0, 0)),
                      pl.BlockSpec((1, D), lambda i: (0, 0))],
            out_specs=pl.BlockSpec((TR, D), lambda i: (i, 0)),
        ),
        compiler_params=pltpu.CompilerParams(
            dimension_semantics=("parallel",),
            vmem_limit_bytes=32 * 1024 * 1024),
    )(x, w.astype(jnp.float32).reshape(1, D), b.astype(jnp.float32).reshape(1, D))
    return out[:R] if Rp != R else out


@jax.jit
def pl_layernorm_res(x, res, w, b):
    R, D = x.shape
    Rp = _round_up(max(R, 8), 8)
    TR = _pick_tile(Rp, 512, 8)
    x = _pad2d(x, Rp, D, jnp.float32)
    res = _pad2d(res, Rp, D, jnp.float32)
    out = pl.pallas_call(
        _ln_res_kernel,
        out_shape=jax.ShapeDtypeStruct((Rp, D), jnp.float32),
        grid_spec=pltpu.PrefetchScalarGridSpec(
            num_scalar_prefetch=0,
            grid=(Rp // TR,),
            in_specs=[pl.BlockSpec((TR, D), lambda i: (i, 0)),
                      pl.BlockSpec((TR, D), lambda i: (i, 0)),
                      pl.BlockSpec((1, D), lambda i: (0, 0)),
                      pl.BlockSpec((1, D), lambda i: (0, 0))],
            out_specs=pl.BlockSpec((TR, D), lambda i: (i, 0)),
        ),
        compiler_params=pltpu.CompilerParams(
            dimension_semantics=("parallel",),
            vmem_limit_bytes=32 * 1024 * 1024),
    )(x, res, w.astype(jnp.float32).reshape(1, D), b.astype(jnp.float32).reshape(1, D))
    return out[:R] if Rp != R else out


# ----------------------------------------------------------------------------
# Fused FFN:  relu(x @ W1^T + b1) @ W2^T + b2  (hidden activation stays in VMEM)
# ----------------------------------------------------------------------------
def _ffn_kernel(x_ref, w1_ref, b1_ref, w2_ref, b2_ref, o_ref):
    h = jnp.dot(x_ref[...], w1_ref[...], preferred_element_type=jnp.float32)
    h = jnp.maximum(h + b1_ref[...], 0.0)
    o_ref[...] = (jnp.dot(h.astype(jnp.bfloat16), w2_ref[...],
                          preferred_element_type=jnp.float32) + b2_ref[...])


@jax.jit
def pl_ffn(x, w1, b1, w2, b2):
    """x:(R,E); w1:(4E,E) b1:(4E,) w2:(E,4E) b2:(E,)."""
    R, E = x.shape
    H4 = w1.shape[0]
    if 2 * E * H4 * 2 * 2 > 32 * 1024 * 1024:      # weights too large to keep resident
        h = pl_matmul(x, w1.T, b1, relu=True)
        return pl_matmul(h, w2.T, b2)
    Rp = _round_up(max(R, 8), 8)
    TR = _pick_tile(Rp, 256, 8)
    xb = _pad2d(x, Rp, E, jnp.bfloat16)
    w1t = w1.T.astype(jnp.bfloat16)
    w2t = w2.T.astype(jnp.bfloat16)
    b1r = b1.astype(jnp.float32).reshape(1, H4)
    b2r = b2.astype(jnp.float32).reshape(1, E)
    out = pl.pallas_call(
        _ffn_kernel,
        out_shape=jax.ShapeDtypeStruct((Rp, E), jnp.float32),
        grid_spec=pltpu.PrefetchScalarGridSpec(
            num_scalar_prefetch=0,
            grid=(Rp // TR,),
            in_specs=[
                pl.BlockSpec((TR, E), lambda i: (i, 0)),
                pl.BlockSpec((E, H4), lambda i: (0, 0)),
                pl.BlockSpec((1, H4), lambda i: (0, 0)),
                pl.BlockSpec((H4, E), lambda i: (0, 0)),
                pl.BlockSpec((1, E), lambda i: (0, 0)),
            ],
            out_specs=pl.BlockSpec((TR, E), lambda i: (i, 0)),
        ),
        compiler_params=pltpu.CompilerParams(
            dimension_semantics=("parallel",),
            vmem_limit_bytes=32 * 1024 * 1024),
        cost_estimate=pl.CostEstimate(
            flops=4 * Rp * E * H4, transcendentals=0,
            bytes_accessed=2 * (Rp * E + 2 * E * H4) + 4 * Rp * E),
    )(xb, w1t, b1r, w2t, b2r)
    return out[:R] if Rp != R else out


# ----------------------------------------------------------------------------
# Conv / backbone built on the Pallas kernels (NHWC activations)
# ----------------------------------------------------------------------------
def conv2d(x, w, b, stride, padding, relu=False, res=None):
    """x:(B,H,W,Cin) NHWC, w:(Cout,Cin,kh,kw) PyTorch layout, optional fused residual."""
    B, H, W_, Cin = x.shape
    Cout, _, kh, kw = w.shape
    Ho = (H + 2 * padding - kh) // stride + 1
    Wo = (W_ + 2 * padding - kw) // stride + 1
    if kh == 1 and kw == 1 and padding == 0:
        cols = x[:, ::stride, ::stride, :].reshape(B * Ho * Wo, Cin)
        w2 = w.reshape(Cout, Cin).T
    elif kh == 3 and kw == 3 and stride == 1 and padding == 1 and res is None:
        return conv3x3_s1(x, w, b, relu=relu)
    else:
        # 7x7 stem conv and the three stride-2 3x3 convs keep the im2col fallback.
        # TODO(synk): strided direct-conv kernel (pl.ds stride=2) would remove this too.
        xp = jnp.pad(x, ((0, 0), (padding, padding), (padding, padding), (0, 0)))
        pieces = []
        for ki in range(kh):
            for kj in range(kw):
                pieces.append(xp[:, ki:ki + stride * (Ho - 1) + 1:stride,
                                 kj:kj + stride * (Wo - 1) + 1:stride, :])
        cols = jnp.concatenate(pieces, axis=-1).reshape(B * Ho * Wo, kh * kw * Cin)
        w2 = jnp.transpose(w, (2, 3, 1, 0)).reshape(kh * kw * Cin, Cout)
    res2 = res.reshape(B * Ho * Wo, Cout) if res is not None else None
    y = pl_matmul(cols, w2, b, res=res2, relu=relu)
    return y.reshape(B, Ho, Wo, Cout)


def _fold_bn(w, bn, eps=1e-5):
    scale = bn["gamma"] / jnp.sqrt(bn["var"] + eps)
    return w * scale[:, None, None, None], bn["beta"] - bn["mean"] * scale


def conv_bn(x, w, bn, stride, padding, relu, res=None):
    w_f, b_f = _fold_bn(w, bn)
    return conv2d(x, w_f, b_f, stride, padding, relu=relu, res=res)


def maxpool3x3s2p1(x):
    # TODO(synk): maxpool kept as plain-JAX elementwise max (cheap vs conv GEMMs).
    B, H, W_, C = x.shape
    Ho = (H + 2 - 3) // 2 + 1
    Wo = (W_ + 2 - 3) // 2 + 1
    xp = jnp.pad(x, ((0, 0), (1, 1), (1, 1), (0, 0)), constant_values=-jnp.inf)
    out = jnp.full((B, Ho, Wo, C), -jnp.inf, x.dtype)
    for ki in range(3):
        for kj in range(3):
            out = jnp.maximum(out, xp[:, ki:ki + 2 * (Ho - 1) + 1:2,
                                      kj:kj + 2 * (Wo - 1) + 1:2, :])
    return out


def bottleneck(x, bp):
    s = bp["stride"]
    if "down_w" in bp:
        identity = conv_bn(x, bp["down_w"], bp["down_bn"], s, 0, relu=False)
    else:
        identity = x
    out = conv_bn(x, bp["conv1"], bp["bn1"], 1, 0, relu=True)
    out = conv_bn(out, bp["conv2"], bp["bn2"], s, 1, relu=True)
    # residual add + final ReLU fused into the conv3 (1x1) GEMM epilogue
    return conv_bn(out, bp["conv3"], bp["bn3"], 1, 0, relu=True, res=identity)


# ----------------------------------------------------------------------------
# Transformer pieces (PyTorch nn.Transformer, post-LN, eval semantics)
# ----------------------------------------------------------------------------
def positional_encoding(x, scale):
    # dropout omitted (eval).  TODO(synk): train-mode dropout not reproduced.
    S, N, E = x.shape
    pos = jnp.arange(S, dtype=jnp.float32)[:, None]
    div = jnp.exp(jnp.arange(0, E, 2, dtype=jnp.float32) *
                  (-math.log(10000.0) / E))
    pe = jnp.zeros((S, E), jnp.float32)
    pe = pe.at[:, 0::2].set(jnp.sin(pos * div))
    pe = pe.at[:, 1::2].set(jnp.cos(pos * div))
    return x + scale * pe[:, None, :]


def mha(query, key, value, ap, nhead, key_padding_mask, causal):
    L, N, E = query.shape
    S = key.shape[0]
    hd = E // nhead
    scale = 1.0 / math.sqrt(hd)
    in_w, in_b = ap["in_w"], ap["in_b"]
    qw = in_w[:E] * scale          # fold softmax scale into the Q projection
    qb = in_b[:E] * scale

    if query is key:
        # fused QKV projection: one GEMM with N = 3E
        w_all = jnp.concatenate([qw, in_w[E:]], axis=0)
        b_all = jnp.concatenate([qb, in_b[E:]], axis=0)
        qkv = pl_matmul(query.reshape(L * N, E), w_all.T, b_all)
        q2 = qkv[:, :E].reshape(L, N, E)
        k2 = qkv[:, E:2 * E].reshape(S, N, E)
        v2 = qkv[:, 2 * E:].reshape(S, N, E)
    else:
        q2 = pl_matmul(query.reshape(L * N, E), qw.T, qb).reshape(L, N, E)
        kv = pl_matmul(key.reshape(S * N, E), in_w[E:].T, in_b[E:])
        k2 = kv[:, :E].reshape(S, N, E)
        v2 = kv[:, E:].reshape(S, N, E)

    # TODO(synk): emit the QKV GEMM directly in (N*H, L, hd)-major layout to
    # avoid these XLA transposes.
    q = q2.reshape(L, N, nhead, hd).transpose(1, 2, 0, 3).reshape(N * nhead, L, hd)
    k = k2.reshape(S, N, nhead, hd).transpose(1, 2, 0, 3).reshape(N * nhead, S, hd)
    v = v2.reshape(S, N, nhead, hd).transpose(1, 2, 0, 3).reshape(N * nhead, S, hd)

    Dp = _round_up(max(hd, 128), 128)              # lane-dense head dim
    q = q.astype(jnp.bfloat16)
    k = k.astype(jnp.bfloat16)
    v = v.astype(jnp.bfloat16)
    if Dp != hd:
        pad = ((0, 0), (0, 0), (0, Dp - hd))
        q = jnp.pad(q, pad)
        k = jnp.pad(k, pad)
        v = jnp.pad(v, pad)

    if key_padding_mask is not None:
        kpm_add = jnp.where(key_padding_mask, jnp.float32(_NEG), 0.0)   # (N, S)
    else:
        kpm_add = jnp.zeros((N, S), jnp.float32)
    kpm_add = jnp.broadcast_to(kpm_add[:, None, :],
                               (N, nhead, S)).reshape(N * nhead, S)

    o = pl_attention(q, k, v, kpm_add, causal=causal)                  # (N*H, L, Dp)
    o = o[:, :, :hd]
    o = o.reshape(N, nhead, L, hd).transpose(2, 0, 1, 3).reshape(L * N, E)
    return pl_matmul(o, ap["out_w"].T, ap["out_b"]).reshape(L, N, E)


def _ln3d(x, lnp):
    S, N, E = x.shape
    return pl_layernorm(x.reshape(-1, E), lnp["w"], lnp["b"]).reshape(S, N, E)


def _ln3d_res(x, res, lnp):
    S, N, E = x.shape
    return pl_layernorm_res(x.reshape(-1, E), res.reshape(-1, E),
                            lnp["w"], lnp["b"]).reshape(S, N, E)


def encoder_layer(src, ep, nhead, kpm):
    S, N, E = src.shape
    a = mha(src, src, src, ep["self_attn"], nhead, kpm, causal=False)
    x = _ln3d_res(src, a, ep["ln1"])
    w1, b1 = ep["lin1"]
    w2, b2 = ep["lin2"]
    h = pl_ffn(x.reshape(-1, E), w1, b1, w2, b2).reshape(S, N, E)
    return _ln3d_res(x, h, ep["ln2"])


def decoder_layer(tgt, memory, dp, nhead, tgt_kpm, mem_kpm):
    T, N, E = tgt.shape
    a = mha(tgt, tgt, tgt, dp["self_attn"], nhead, tgt_kpm, causal=True)
    x = _ln3d_res(tgt, a, dp["ln1"])
    a = mha(x, memory, memory, dp["cross_attn"], nhead, mem_kpm, causal=False)
    x = _ln3d_res(x, a, dp["ln2"])
    w1, b1 = dp["lin1"]
    w2, b2 = dp["lin2"]
    h = pl_ffn(x.reshape(-1, E), w1, b1, w2, b2).reshape(T, N, E)
    return _ln3d_res(x, h, dp["ln3"])


# ----------------------------------------------------------------------------
# Parameter init (deterministic, PyTorch-shaped; no checkpoint load)
# ----------------------------------------------------------------------------
class KeyGen:
    def __init__(self, key):
        self.key = key

    def __call__(self):
        self.key, sub = jax.random.split(self.key)
        return sub


def _conv_w(key, cout, cin, kh, kw):
    std = math.sqrt(2.0 / (cin * kh * kw))
    return jax.random.normal(key, (cout, cin, kh, kw), jnp.float32) * std


def _bn(c):
    return dict(gamma=jnp.ones((c,), jnp.float32), beta=jnp.zeros((c,), jnp.float32),
                mean=jnp.zeros((c,), jnp.float32), var=jnp.ones((c,), jnp.float32))


def _linear(key, out_f, in_f):
    k1, k2 = jax.random.split(key)
    lim = 1.0 / math.sqrt(in_f)
    w = jax.random.uniform(k1, (out_f, in_f), jnp.float32, -lim, lim)
    b = jax.random.uniform(k2, (out_f,), jnp.float32, -lim, lim)
    return w, b


def init_params(key, hidden, outtoken, nhead):
    kg = KeyGen(key)
    p = {}
    # ResNet-50 backbone (pretrained=False -> deterministic random init here)
    p["conv1"] = _conv_w(kg(), 64, 3, 7, 7)
    p["bn1"] = _bn(64)
    inplanes, stages = 64, []
    for planes, blocks, stride in [(64, 3, 1), (128, 4, 2), (256, 6, 2), (512, 3, 2)]:
        blk_list = []
        for bi in range(blocks):
            s = stride if bi == 0 else 1
            bp = dict(stride=s,
                      conv1=_conv_w(kg(), planes, inplanes, 1, 1), bn1=_bn(planes),
                      conv2=_conv_w(kg(), planes, planes, 3, 3), bn2=_bn(planes),
                      conv3=_conv_w(kg(), planes * 4, planes, 1, 1), bn3=_bn(planes * 4))
            if s != 1 or inplanes != planes * 4:
                bp["down_w"] = _conv_w(kg(), planes * 4, inplanes, 1, 1)
                bp["down_bn"] = _bn(planes * 4)
            inplanes = planes * 4
            blk_list.append(bp)
        stages.append(blk_list)
    p["stages"] = stages
    # backbone.fc = Conv2d(2048, hidden//2, 1)
    p["fc_w"] = _conv_w(kg(), hidden // 2, 2048, 1, 1)
    lim = 1.0 / math.sqrt(2048)
    p["fc_b"] = jax.random.uniform(kg(), (hidden // 2,), jnp.float32, -lim, lim)
    # positional encoders (scale params init to ones(1))
    p["pos_enc_scale"] = jnp.ones((1,), jnp.float32)
    p["pos_dec_scale"] = jnp.ones((1,), jnp.float32)
    # token embedding
    p["emb"] = jax.random.normal(kg(), (outtoken, hidden), jnp.float32)

    def attn_params():
        w_in, b_in = _linear(kg(), 3 * hidden, hidden)
        w_out, b_out = _linear(kg(), hidden, hidden)
        return dict(in_w=w_in, in_b=b_in, out_w=w_out, out_b=b_out)

    def ln_params():
        return dict(w=jnp.ones((hidden,), jnp.float32), b=jnp.zeros((hidden,), jnp.float32))

    p["enc"] = dict(self_attn=attn_params(),
                    lin1=_linear(kg(), hidden * 4, hidden),
                    lin2=_linear(kg(), hidden, hidden * 4),
                    ln1=ln_params(), ln2=ln_params())
    p["dec"] = dict(self_attn=attn_params(), cross_attn=attn_params(),
                    lin1=_linear(kg(), hidden * 4, hidden),
                    lin2=_linear(kg(), hidden, hidden * 4),
                    ln1=ln_params(), ln2=ln_params(), ln3=ln_params())
    p["enc_norm"] = ln_params()
    p["dec_norm"] = ln_params()
    p["fc_out"] = _linear(kg(), outtoken, hidden)
    return p


# ----------------------------------------------------------------------------
# Full forward (mirrors TransformerModel.forward)
# ----------------------------------------------------------------------------
def transformer_model_forward(params, src_img, trg, hidden, nhead):
    T, N = trg.shape
    # backbone (convert NCHW input to NHWC once; backbone stays channels-last)
    x = jnp.transpose(src_img, (0, 2, 3, 1))
    x = conv_bn(x, params["conv1"], params["bn1"], 2, 3, relu=True)
    x = maxpool3x3s2p1(x)
    for stage in params["stages"]:
        for bp in stage:
            x = bottleneck(x, bp)
    x = conv2d(x, params["fc_w"], params["fc_b"], 1, 0, relu=False)  # (B, H', W', h/2)
    # PyTorch (NCHW): x.permute(0,3,1,2).flatten(2).permute(1,0,2)
    # NHWC equivalent: (B,H',W',C) -> (B,W',C,H') -> (B,W',C*H') -> (W',B,C*H')
    B, Hp, Wp, C = x.shape
    assert C * Hp == hidden, "backbone feature dim must equal d_model"
    x = jnp.transpose(x, (0, 2, 3, 1)).reshape(B, Wp, C * Hp)
    x = jnp.transpose(x, (1, 0, 2))                                  # (S, B, E)

    src_pad_mask = (x[:, :, 0] == 0).T                               # (B, S)
    src_seq = positional_encoding(x, params["pos_enc_scale"][0])

    trg_pad_mask = (trg == 0).T                                      # (B, T)
    tgt = params["emb"][trg]                                         # (T, B, E)
    tgt = positional_encoding(tgt, params["pos_dec_scale"][0])

    memory = encoder_layer(src_seq, params["enc"], nhead, src_pad_mask)
    memory = _ln3d(memory, params["enc_norm"])                       # final encoder norm
    out = decoder_layer(tgt, memory, params["dec"], nhead,
                        trg_pad_mask, src_pad_mask)
    out = _ln3d(out, params["dec_norm"])                             # final decoder norm

    fw, fb = params["fc_out"]
    logits = pl_matmul(out.reshape(T * N, hidden), fw.T, fb).reshape(T, N, -1)
    return logits


# ----------------------------------------------------------------------------
if __name__ == "__main__":
    hidden, outtoken, nhead = 32, 16, 1
    key = jax.random.PRNGKey(0)
    params = init_params(key, hidden, outtoken, nhead)

    k_img, k_trg = jax.random.split(jax.random.fold_in(key, 123))
    # input height 64 -> backbone H'=2 so that (hidden/2)*H' == hidden (d_model)
    src = jax.random.normal(k_img, (2, 3, 64, 64), jnp.float32)      # NCHW
    trg = jax.random.randint(k_trg, (5, 2), 1, outtoken)             # (T, N), no pad token

    logits = transformer_model_forward(params, src, trg, hidden, nhead)
    logits = jax.block_until_ready(logits)

    assert logits.shape == (5, 2, outtoken), logits.shape
    assert bool(jnp.isfinite(logits).all())
    print("KERNEL_OK")
</pallas_src>

<mosaic_0001>
module attributes {stable_mosaic.version = 11 : i64} {
  func.func @_mm_kernel(%arg0: i32, %arg1: i32, %arg2: i32, %arg3: memref<256x256xbf16, #tpu.memory_space<vmem>>, %arg4: memref<256x128xbf16, #tpu.memory_space<vmem>>, %arg5: memref<1x128xf32, #tpu.memory_space<vmem>>, %arg6: memref<256x128xf32, #tpu.memory_space<vmem>>) attributes {dimension_semantics = [#tpu.dimension_semantics<parallel>, #tpu.dimension_semantics<parallel>, #tpu.dimension_semantics<arbitrary>], iteration_bounds = array<i64: 8, 1, 1>, scalar_prefetch = 0 : i64, scratch_operands = 0 : i64, tpu.core_type = #tpu.core_type<tc>, window_params = [{transform_indices = @transform_0, window_bounds = array<i64: 256, 256>}, {transform_indices = @transform_1, window_bounds = array<i64: 256, 128>}, {transform_indices = @transform_2, window_bounds = array<i64: 1, 128>}, {transform_indices = @transform_3, window_bounds = array<i64: 256, 128>}]} {
    %c0_i32 = arith.constant 0 : i32
    %0 = arith.cmpi eq, %arg2, %c0_i32 : i32
    %1 = arith.extui %0 : i1 to i32
    %c0_i32_0 = arith.constant 0 : i32
    %2 = arith.cmpi ne, %1, %c0_i32_0 : i32
    scf.if %2 {
      %cst_10 = arith.constant 0.000000e+00 : f32
      %12 = vector.broadcast %cst_10 : f32 to vector<256x128xf32>
      %c0_11 = arith.constant 0 : index
      %c0_12 = arith.constant 0 : index
      %13 = vector.load %arg6[%c0_11, %c0_12] : memref<256x128xf32, #tpu.memory_space<vmem>>, vector<256x128xf32>
      tpu.vector_store %arg6[%c0_11, %c0_12], %12 {strides = array<i32>} : memref<256x128xf32, #tpu.memory_space<vmem>>, vector<256x128xf32>,
    } else {
    }
    %c0 = arith.constant 0 : index
    %c0_1 = arith.constant 0 : index
    %3 = vector.load %arg6[%c0, %c0_1] : memref<256x128xf32, #tpu.memory_space<vmem>>, vector<256x128xf32>
    %c0_2 = arith.constant 0 : index
    %c0_3 = arith.constant 0 : index
    %4 = vector.load %arg3[%c0_2, %c0_3] : memref<256x256xbf16, #tpu.memory_space<vmem>>, vector<256x256xbf16>
    %c0_4 = arith.constant 0 : index
    %c0_5 = arith.constant 0 : index
    %5 = vector.load %arg4[%c0_4, %c0_5] : memref<256x128xbf16, #tpu.memory_space<vmem>>, vector<256x128xbf16>
    %cst = arith.constant dense<0.000000e+00> : vector<256x128xf32>
    %6 = tpu.matmul %4, %5, %cst {dimension_numbers = #tpu.dot_dimension_numbers<[1], [0], [0], [1], [0, 0, 1, 1], [], []>} : vector<256x256xbf16>, vector<256x128xbf16>, vector<256x128xf32> -> vector<256x128xf32>
    %7 = arith.addf %3, %6 : vector<256x128xf32>
    %c0_6 = arith.constant 0 : index
    %c0_7 = arith.constant 0 : index
    %8 = vector.load %arg6[%c0_6, %c0_7] : memref<256x128xf32, #tpu.memory_space<vmem>>, vector<256x128xf32>
    tpu.vector_store %arg6[%c0_6, %c0_7], %7 {strides = array<i32>} : memref<256x128xf32, #tpu.memory_space<vmem>>, vector<256x128xf32>,
    %c0_i32_8 = arith.constant 0 : i32
    %9 = arith.cmpi eq, %arg2, %c0_i32_8 : i32
    %10 = arith.extui %9 : i1 to i32
    %c0_i32_9 = arith.constant 0 : i32
    %11 = arith.cmpi ne, %10, %c0_i32_9 : i32
    scf.if %11 {
      %c0_10 = arith.constant 0 : index
      %c0_11 = arith.constant 0 : index
      %12 = vector.load %arg6[%c0_10, %c0_11] : memref<256x128xf32, #tpu.memory_space<vmem>>, vector<256x128xf32>
      %c0_12 = arith.constant 0 : index
      %c0_13 = arith.constant 0 : index
      %13 = vector.load %arg5[%c0_12, %c0_13] : memref<1x128xf32, #tpu.memory_space<vmem>>, vector<1x128xf32>
      %14 = vector.broadcast %13 : vector<1x128xf32> to vector<256x128xf32>
      %15 = arith.addf %12, %14 : vector<256x128xf32>
      %cst_14 = arith.constant 0.000000e+00 : f32
      %16 = vector.broadcast %cst_14 : f32 to vector<256x128xf32>
      %17 = arith.maximumf %15, %16 : vector<256x128xf32>
      %c0_15 = arith.constant 0 : index
      %c0_16 = arith.constant 0 : index
      %18 = vector.load %arg6[%c0_15, %c0_16] : memref<256x128xf32, #tpu.memory_space<vmem>>, vector<256x128xf32>
      tpu.vector_store %arg6[%c0_15, %c0_16], %17 {strides = array<i32>} : memref<256x128xf32, #tpu.memory_space<vmem>>, vector<256x128xf32>,
    } else {
    }
    return
  }
  func.func @transform_0(%arg0: i32, %arg1: i32, %arg2: i32) -> (i32, i32) {
    %c0_i32 = arith.constant 0 : i32
    return %arg0, %arg2 : i32, i32
  }
  func.func @transform_1(%arg0: i32, %arg1: i32, %arg2: i32) -> (i32, i32) {
    %c0_i32 = arith.constant 0 : i32
    return %arg2, %arg1 : i32, i32
  }
  func.func @transform_2(%arg0: i32, %arg1: i32, %arg2: i32) -> (i32, i32) {
    %c0_i32 = arith.constant 0 : i32
    %c0_i32_0 = arith.constant 0 : i32
    return %c0_i32, %arg1 : i32, i32
  }
  func.func @transform_3(%arg0: i32, %arg1: i32, %arg2: i32) -> (i32, i32) {
    %c0_i32 = arith.constant 0 : i32
    return %arg0, %arg1 : i32, i32
  }
}

</mosaic_0001>

<llo_original>
// kernel: pl_matmul.1
$region0: #{pl_matmul.1}
  #allocation0 [shape = 'u32[]', space=smem, size = 0x4, offset = 0x4, fixed_abs, tag = 'smem constant byte address 0x4 - core index']
  #allocation1 [shape = 'u32[72,128]{1,0:T(1,128)}', space=vmem, size = 0x9000, scoped, tag = 'internal scratch']
  %s0 = inlined_call_operand.vmem [shape: bf16[2048,256], index: 0, kind: input, shape index: {}]
  %s1 = inlined_call_operand.vmem [shape: bf16[256,128], index: 1, kind: input, shape index: {}]
  %s2 = inlined_call_operand.vmem [shape: f32[1,128], index: 2, kind: input, shape index: {}]
  %s3 = inlined_call_operand.vmem [shape: f32[2048,128], index: 3, kind: output, shape index: {}]
  %s4 = sld [smem:[#allocation0]]
  $region53: #{pl_matmul.1} parent=0
    _
  %s6 = ssub.s32 1, %s4
  %s7 = scalar_select 0, %s6, %s4
  loop: start=0, step=1, limit=10
  $region2: #{pl_matmul.1} parent=0 // loop_pre_header
    _
  $region3: #{pl_matmul.1} parent=0 // loop_header
    %s9 = sphi 0, %s13
    %p10 = scmp.ge.s32.totalorder %s9, 10
    %s16 = sphi 0, %s35
    %s17 = sphi 0, %s31
    %s18 = sphi 0, %s27
    %s19 = sphi 0, %s16
    %s20 = sphi 0, %s17
    %s21 = sphi 0, %s18
    %s22 = sphi 0, %s19
    %s23 = sphi 0, %s20
    %s24 = sphi 0, %s21
    %s40 = sphi 0, %s42
    %s43 = sphi 0, %s40
    %s44 = sphi 0, %s43
    %s60 = sphi 0, %s44
    %s68 = sphi 0, %s70
    %s71 = sphi 0, %s68
    %s72 = sphi 0, %s71
    %s88 = sphi 0, %s72
    %s94 = sphi 0, %s96
    %s97 = sphi 0, %s94
    %s98 = sphi 0, %s97
    %s114 = sphi 0, %s98
    %s122 = sphi 0, %s124
    %s125 = sphi 0, %s122
    %s126 = sphi 0, %s125
    %s142 = sphi 0, %s126
  $region4: #{pl_matmul.1} parent=0 // loop_header_branch
    %12 = sbr.rel (%p10) target = $region8
  $region5: #{pl_matmul.1} parent=0 // loop_body
    %s14 = ssub.s32 %s9, 1
    %s15 = ssub.s32 %s9, 2
    %s25 = sadd.s32 1, %s18
    %p26 = scmp.ge.s32.totalorder %s25, 1
    %s27 = scalar_select %p26, 0, %s25
    %s28 = sadd.s32 1, %s17
    %s29 = scalar_select %p26, %s28, %s17
    %p30 = scmp.ge.s32.totalorder %s29, 1
    %s31 = scalar_select %p30, 0, %s29
    %s32 = sadd.s32 1, %s16
    %s33 = scalar_select %p30, %s32, %s16
    %p34 = scmp.ge.s32.totalorder %s33, 8
    %s35 = scalar_select %p34, 0, %s33
    %s36 = ssub.s32 %s16, %s35
    %s37 = ssub.s32 %s18, %s27
    %s38 = sor.u32 %s36, %s37
    %p39 = scmp.eq.s32.totalorder %s38, 0
    %s41 = sadd.s32 %s40, 1
    %s42 = scalar_select %p39, %s40, %s41
    %p45 = pneg %p39
    %p46 = scmp.eq.s32.totalorder %s9, 7
    %p47 = por %p45, %p46
    %p48 = scmp.ne.s32.totalorder %s40, %s43
    %p49 = scmp.eq.s32.totalorder %s9, 0
    %p50 = por %p48, %p49
    %p51 = scmp.ne.s32.totalorder %s40, %s43
    %p52 = scmp.eq.s32.totalorder %s14, 7
    %p53 = por %p51, %p52
    %p54 = scmp.ne.s32.totalorder %s43, %s44
    %p55 = scmp.eq.s32.totalorder %s14, 0
    %p56 = por %p54, %p55
    %p57 = scmp.ne.s32.totalorder %s43, %s44
    %p58 = scmp.eq.s32.totalorder %s15, 7
    %p59 = por %p57, %p58
    %p61 = scmp.ne.s32.totalorder %s44, %s60
    %p62 = scmp.eq.s32.totalorder %s15, 0
    %p63 = por %p61, %p62
    %s64 = ssub.s32 %s18, %s27
    %s65 = ssub.s32 %s17, %s31
    %s66 = sor.u32 %s64, %s65
    %p67 = scmp.eq.s32.totalorder %s66, 0
    %s69 = sadd.s32 %s68, 1
    %s70 = scalar_select %p67, %s68, %s69
    %p73 = pneg %p67
    %p74 = scmp.eq.s32.totalorder %s9, 7
    %p75 = por %p73, %p74
    %p76 = scmp.ne.s32.totalorder %s68, %s71
    %p77 = scmp.eq.s32.totalorder %s9, 0
    %p78 = por %p76, %p77
    %p79 = scmp.ne.s32.totalorder %s68, %s71
    %p80 = scmp.eq.s32.totalorder %s14, 7
    %p81 = por %p79, %p80
    %p82 = scmp.ne.s32.totalorder %s71, %s72
    %p83 = scmp.eq.s32.totalorder %s14, 0
    %p84 = por %p82, %p83
    %p85 = scmp.ne.s32.totalorder %s71, %s72
    %p86 = scmp.eq.s32.totalorder %s15, 7
    %p87 = por %p85, %p86
    %p89 = scmp.ne.s32.totalorder %s72, %s88
    %p90 = scmp.eq.s32.totalorder %s15, 0
    %p91 = por %p89, %p90
    %s92 = ssub.s32 %s17, %s31
    %p93 = scmp.eq.s32.totalorder %s92, 0
    %s95 = sadd.s32 %s94, 1
    %s96 = scalar_select %p93, %s94, %s95
    %p99 = pneg %p93
    %p100 = scmp.eq.s32.totalorder %s9, 7
    %p101 = por %p99, %p100
    %p102 = scmp.ne.s32.totalorder %s94, %s97
    %p103 = scmp.eq.s32.totalorder %s9, 0
    %p104 = por %p102, %p103
    %p105 = scmp.ne.s32.totalorder %s94, %s97
    %p106 = scmp.eq.s32.totalorder %s14, 7
    %p107 = por %p105, %p106
    %p108 = scmp.ne.s32.totalorder %s97, %s98
    %p109 = scmp.eq.s32.totalorder %s14, 0
    %p110 = por %p108, %p109
    %p111 = scmp.ne.s32.totalorder %s97, %s98
    %p112 = scmp.eq.s32.totalorder %s15, 7
    %p113 = por %p111, %p112
    %p115 = scmp.ne.s32.totalorder %s98, %s114
    %p116 = scmp.eq.s32.totalorder %s15, 0
    %p117 = por %p115, %p116
    %s118 = ssub.s32 %s16, %s35
    %s119 = ssub.s32 %s17, %s31
    %s120 = sor.u32 %s118, %s119
    %p121 = scmp.eq.s32.totalorder %s120, 0
    %s123 = sadd.s32 %s122, 1
    %s124 = scalar_select %p121, %s122, %s123
    %p127 = pneg %p121
    %p128 = scmp.eq.s32.totalorder %s9, 7
    %p129 = por %p127, %p128
    %p130 = scmp.ne.s32.totalorder %s122, %s125
    %p131 = scmp.eq.s32.totalorder %s9, 0
    %p132 = por %p130, %p131
    %p133 = scmp.ne.s32.totalorder %s122, %s125
    %p134 = scmp.eq.s32.totalorder %s14, 7
    %p135 = por %p133, %p134
    %p136 = scmp.ne.s32.totalorder %s125, %s126
    %p137 = scmp.eq.s32.totalorder %s14, 0
    %p138 = por %p136, %p137
    %p139 = scmp.ne.s32.totalorder %s125, %s126
    %p140 = scmp.eq.s32.totalorder %s15, 7
    %p141 = por %p139, %p140
    %p143 = scmp.ne.s32.totalorder %s126, %s142
    %p144 = scmp.eq.s32.totalorder %s15, 0
    %p145 = por %p143, %p144
    %p146 = scmp.le.s32.totalorder 1, %s9
    %p147 = scmp.lt.s32.totalorder %s9, 9
    %p148 = pnand %p146, %p147
    %p149 = pneg %p148
    // Predicated region
    $region9: #{pl_matmul.1} parent=5 // pred_check
      _
    $region10: #{pl_matmul.1} parent=5 // pred_check_branch
      %151 = sbr.rel (%p148) target = $region12
    $region11: #{pl_matmul.1} parent=5 // pred_region
      %s152 = ssub.s32 %s9, 1
      // Predicated region
      $region13: #{pl_matmul.1} parent=11 // pred_check
        %p153 = pneg %p84
      $region14: #{pl_matmul.1} parent=11 // pred_check_branch
        %155 = sbr.rel (%p153) target = $region16
      $region15: #{pl_matmul.1} parent=11 // pred_region
        %s156 = smul.u32 32, %s21
        %p157 = scmp.lt.s32.totalorder %s156, 31
        %s158 = scalar_select %p157, %s156, 31
        %p159 = scmp.lt.s32.totalorder %s20, 0
        %s160 = scalar_select %p159, %s20, 0
        %s161 = sadd.s32 %s160, %s158
        %s162 = smul.addr %s161, 4
        %s163 = scalar_lea.vmem %s1, %s162
        %s164 = smul.u32 32, %s21
      $region16: #{pl_matmul.1} parent=11 // pred_fallthru
        _
      // Predicated region
      $region17: #{pl_matmul.1} parent=11 // pred_check
        %p165 = pneg %p110
      $region18: #{pl_matmul.1} parent=11 // pred_check_branch
        %167 = sbr.rel (%p165) target = $region20
      $region19: #{pl_matmul.1} parent=11 // pred_region
        %p168 = scmp.lt.s32.totalorder %s20, 0
        %s169 = scalar_select %p168, %s20, 0
        %s170 = scalar_lea.vmem %s2, %s169
      $region20: #{pl_matmul.1} parent=11 // pred_fallthru
        _
    $region12: #{pl_matmul.1} parent=5 // pred_fallthru
      _
    %p171 = scmp.lt.s32.totalorder %s9, 8
    // Predicated region
    $region21: #{pl_matmul.1} parent=5 // pred_check
      %p172 = pneg %p171
    $region22: #{pl_matmul.1} parent=5 // pred_check_branch
      %174 = sbr.rel (%p172) target = $region24
    $region23: #{pl_matmul.1} parent=5 // pred_region
      // Predicated region
      $region25: #{pl_matmul.1} parent=23 // pred_check
        %p175 = pneg %p50
      $region26: #{pl_matmul.1} parent=23 // pred_check_branch
        %177 = sbr.rel (%p175) target = $region28
      $region27: #{pl_matmul.1} parent=23 // pred_region
        %s178 = smul.u32 32, %s16
        %s179 = smul.u32 2, %s18
        %p180 = scmp.lt.s32.totalorder %s178, 255
        %s181 = scalar_select %p180, %s178, 255
        %p182 = scmp.lt.s32.totalorder %s179, 1
        %s183 = scalar_select %p182, %s179, 1
        %s184 = smul.addr %s181, 2
        %s185 = sadd.s32 %s183, %s184
        %s186 = smul.addr %s185, 4
        %s187 = scalar_lea.vmem %s0, %s186
        %s188 = smul.u32 32, %s16
        %s189 = smul.u32 2, %s18
      $region28: #{pl_matmul.1} parent=23 // pred_fallthru
        _
    $region24: #{pl_matmul.1} parent=5 // pred_fallthru
      _
    %p190 = scmp.le.s32.totalorder 1, %s9
    %p191 = scmp.lt.s32.totalorder %s9, 9
    %p192 = pnand %p190, %p191
    %p193 = pneg %p192
    // Predicated region
    $region29: #{pl_matmul.1} parent=5 // pred_check
      _
    $region30: #{pl_matmul.1} parent=5 // pred_check_branch
      %195 = sbr.rel (%p192) target = $region32
    $region31: #{pl_matmul.1} parent=5 // pred_region
      %s196 = ssub.s32 %s9, 1
      %s197 = smul.u32 32, %s19
      %s198 = smul.u32 2, %s21
      %p199 = scmp.lt.s32.totalorder %s197, 255
      %s200 = scalar_select %p199, %s197, 255
      %p201 = scmp.lt.s32.totalorder %s198, 1
      %s202 = scalar_select %p201, %s198, 1
      %s203 = smul.addr %s200, 2
      %s204 = sadd.s32 %s202, %s203
      %s205 = smul.addr %s204, 4
      %s206 = scalar_lea.vmem %s0, %s205
      %p207 = pneg %p56
      %p208 = pneg %p53
      %s209 = smul.u32 32, %s21
      %p210 = scmp.lt.s32.totalorder %s209, 31
      %s211 = scalar_select %p210, %s209, 31
      %p212 = scmp.lt.s32.totalorder %s20, 0
      %s213 = scalar_select %p212, %s20, 0
      %s214 = sadd.s32 %s213, %s211
      %s215 = smul.addr %s214, 4
      %s216 = scalar_lea.vmem %s1, %s215
      %p217 = pneg %p84
      %p218 = pneg %p81
      %p219 = scmp.lt.s32.totalorder %s20, 0
      %s220 = scalar_select %p219, %s20, 0
      %s221 = scalar_lea.vmem %s2, %s220
      %p222 = pneg %p110
      %p223 = pneg %p107
      %p224 = pneg %p138
      %p225 = pneg %p135
      %s226 = smul.u32 32, %s19
      %p227 = scmp.lt.s32.totalorder %s226, 255
      %s228 = scalar_select %p227, %s226, 255
      %p229 = scmp.lt.s32.totalorder %s20, 0
      %s230 = scalar_select %p229, %s20, 0
      %s231 = sadd.s32 %s230, %s228
      %s232 = smul.addr %s231, 8
      %s233 = scalar_lea.vmem %s3, %s232
      %s234 = smul.u32 32, %s19
      %s235 = smul.u32 2, %s21
      %p236 = scmp.lt.s32.totalorder %s234, 255
      %s237 = scalar_select %p236, %s234, 255
      %p238 = scmp.lt.s32.totalorder %s235, 1
      %s239 = scalar_select %p238, %s235, 1
      %s240 = smul.addr %s237, 2
      %s241 = sadd.s32 %s239, %s240
      %s242 = smul.addr %s241, 4
      %s243 = scalar_lea.vmem %s0, %s242
      %s244 = smul.u32 32, %s19
      %s245 = smul.u32 2, %s21
      %s246 = smul.u32 32, %s21
      %p247 = scmp.lt.s32.totalorder %s246, 31
      %s248 = scalar_select %p247, %s246, 31
      %p249 = scmp.lt.s32.totalorder %s20, 0
      %s250 = scalar_select %p249, %s20, 0
      %s251 = sadd.s32 %s250, %s248
      %s252 = smul.addr %s251, 4
      %s253 = scalar_lea.vmem %s1, %s252
      %s254 = smul.u32 32, %s21
      %p255 = scmp.lt.s32.totalorder %s20, 0
      %s256 = scalar_select %p255, %s20, 0
      %s257 = scalar_lea.vmem %s2, %s256
      %s258 = smul.u32 32, %s19
      %p259 = scmp.lt.s32.totalorder %s258, 255
      %s260 = scalar_select %p259, %s258, 255
      %p261 = scmp.lt.s32.totalorder %s20, 0
      %s262 = scalar_select %p261, %s20, 0
      %s263 = sadd.s32 %s262, %s260
      %s264 = smul.addr %s263, 8
      %s265 = scalar_lea.vmem %s3, %s264
      %s266 = smul.u32 32, %s19
      %p267 = scmp.eq.s32.totalorder %s21, 0
      // Predicated region
      $region33: #{pl_matmul.1} parent=31 // pred_check
        %p268 = pneg %p267
      $region34: #{pl_matmul.1} parent=31 // pred_check_branch
        %270 = sbr.rel (%p268) target = $region36
      $region35: #{pl_matmul.1} parent=31 // pred_region
        %271 = vst [vmem:[%s265] sm:$0xff] 0.0
        %272 = vst [vmem:[%s265 + $0x8] sm:$0xff] 0.0
        %273 = vst [vmem:[%s265 + $0x10] sm:$0xff] 0.0
        %274 = vst [vmem:[%s265 + $0x18] sm:$0xff] 0.0
        %275 = vst [vmem:[%s265 + $0x20] sm:$0xff] 0.0
        %276 = vst [vmem:[%s265 + $0x28] sm:$0xff] 0.0
        %277 = vst [vmem:[%s265 + $0x30] sm:$0xff] 0.0
        %278 = vst [vmem:[%s265 + $0x38] sm:$0xff] 0.0
        %279 = vst [vmem:[%s265 + $0x40] sm:$0xff] 0.0
        %280 = vst [vmem:[%s265 + $0x48] sm:$0xff] 0.0
        %281 = vst [vmem:[%s265 + $0x50] sm:$0xff] 0.0
        %282 = vst [vmem:[%s265 + $0x58] sm:$0xff] 0.0
        %283 = vst [vmem:[%s265 + $0x60] sm:$0xff] 0.0
        %284 = vst [vmem:[%s265 + $0x68] sm:$0xff] 0.0
        %285 = vst [vmem:[%s265 + $0x70] sm:$0xff] 0.0
        %286 = vst [vmem:[%s265 + $0x78] sm:$0xff] 0.0
        %287 = vst [vmem:[%s265 + $0x80] sm:$0xff] 0.0
        %288 = vst [vmem:[%s265 + $0x88] sm:$0xff] 0.0
        %289 = vst [vmem:[%s265 + $0x90] sm:$0xff] 0.0
        %290 = vst [vmem:[%s265 + $0x98] sm:$0xff] 0.0
        %291 = vst [vmem:[%s265 + $0xa0] sm:$0xff] 0.0
        %292 = vst [vmem:[%s265 + $0xa8] sm:$0xff] 0.0
        %293 = vst [vmem:[%s265 + $0xb0] sm:$0xff] 0.0
        %294 = vst [vmem:[%s265 + $0xb8] sm:$0xff] 0.0
        %295 = vst [vmem:[%s265 + $0xc0] sm:$0xff] 0.0
        %296 = vst [vmem:[%s265 + $0xc8] sm:$0xff] 0.0
        %297 = vst [vmem:[%s265 + $0xd0] sm:$0xff] 0.0
        %298 = vst [vmem:[%s265 + $0xd8] sm:$0xff] 0.0
        %299 = vst [vmem:[%s265 + $0xe0] sm:$0xff] 0.0
        %300 = vst [vmem:[%s265 + $0xe8] sm:$0xff] 0.0
        %301 = vst [vmem:[%s265 + $0xf0] sm:$0xff] 0.0
        %302 = vst [vmem:[%s265 + $0xf8] sm:$0xff] 0.0
      $region36: #{pl_matmul.1} parent=31 // pred_fallthru
        _
      %v303 = vld [vmem:[%s265] sm:$0xff]
      %v304 = vld [vmem:[%s265 + $0x8] sm:$0xff]
      %v305 = vld [vmem:[%s265 + $0x10] sm:$0xff]
      %v306 = vld [vmem:[%s265 + $0x18] sm:$0xff]
      %v307 = vld [vmem:[%s265 + $0x20] sm:$0xff]
      %v308 = vld [vmem:[%s265 + $0x28] sm:$0xff]
      %v309 = vld [vmem:[%s265 + $0x30] sm:$0xff]
      %v310 = vld [vmem:[%s265 + $0x38] sm:$0xff]
      %v311 = vld [vmem:[%s265 + $0x40] sm:$0xff]
      %v312 = vld [vmem:[%s265 + $0x48] sm:$0xff]
      %v313 = vld [vmem:[%s265 + $0x50] sm:$0xff]
      %v314 = vld [vmem:[%s265 + $0x58] sm:$0xff]
      %v315 = vld [vmem:[%s265 + $0x60] sm:$0xff]
      %v316 = vld [vmem:[%s265 + $0x68] sm:$0xff]
      %v317 = vld [vmem:[%s265 + $0x70] sm:$0xff]
      %v318 = vld [vmem:[%s265 + $0x78] sm:$0xff]
      %v319 = vld [vmem:[%s265 + $0x80] sm:$0xff]
      %v320 = vld [vmem:[%s265 + $0x88] sm:$0xff]
      %v321 = vld [vmem:[%s265 + $0x90] sm:$0xff]
      %v322 = vld [vmem:[%s265 + $0x98] sm:$0xff]
      %v323 = vld [vmem:[%s265 + $0xa0] sm:$0xff]
      %v324 = vld [vmem:[%s265 + $0xa8] sm:$0xff]
      %v325 = vld [vmem:[%s265 + $0xb0] sm:$0xff]
      %v326 = vld [vmem:[%s265 + $0xb8] sm:$0xff]
      %v327 = vld [vmem:[%s265 + $0xc0] sm:$0xff]
      %v328 = vld [vmem:[%s265 + $0xc8] sm:$0xff]
      %v329 = vld [vmem:[%s265 + $0xd0] sm:$0xff]
      %v330 = vld [vmem:[%s265 + $0xd8] sm:$0xff]
      %v331 = vld [vmem:[%s265 + $0xe0] sm:$0xff]
      %v332 = vld [vmem:[%s265 + $0xe8] sm:$0xff]
      %v333 = vld [vmem:[%s265 + $0xf0] sm:$0xff]
      %v334 = vld [vmem:[%s265 + $0xf8] sm:$0xff]
      %v335 = vld [vmem:[%s243] sm:$0xff]
      %v336 = vld [vmem:[%s243 + $0x8] sm:$0xff]
      %v337 = vld [vmem:[%s243 + $0x10] sm:$0xff]
      %v338 = vld [vmem:[%s243 + $0x18] sm:$0xff]
      %v339 = vld [vmem:[%s243 + $0x20] sm:$0xff]
      %v340 = vld [vmem:[%s243 + $0x28] sm:$0xff]
      %v341 = vld [vmem:[%s243 + $0x30] sm:$0xff]
      %v342 = vld [vmem:[%s243 + $0x38] sm:$0xff]
      %v343 = vld [vmem:[%s243 + $0x40] sm:$0xff]
      %v344 = vld [vmem:[%s243 + $0x48] sm:$0xff]
      %v345 = vld [vmem:[%s243 + $0x50] sm:$0xff]
      %v346 = vld [vmem:[%s243 + $0x58] sm:$0xff]
      %v347 = vld [vmem:[%s243 + $0x60] sm:$0xff]
      %v348 = vld [vmem:[%s243 + $0x68] sm:$0xff]
      %v349 = vld [vmem:[%s243 + $0x70] sm:$0xff]
      %v350 = vld [vmem:[%s243 + $0x78] sm:$0xff]
      %v351 = vld [vmem:[%s243 + $0x80] sm:$0xff]
      %v352 = vld [vmem:[%s243 + $0x88] sm:$0xff]
      %v353 = vld [vmem:[%s243 + $0x90] sm:$0xff]
      %v354 = vld [vmem:[%s243 + $0x98] sm:$0xff]
      %v355 = vld [vmem:[%s243 + $0xa0] sm:$0xff]
      %v356 = vld [vmem:[%s243 + $0xa8] sm:$0xff]
      %v357 = vld [vmem:[%s243 + $0xb0] sm:$0xff]
      %v358 = vld [vmem:[%s243 + $0xb8] sm:$0xff]
      %v359 = vld [vmem:[%s243 + $0xc0] sm:$0xff]
      %v360 = vld [vmem:[%s243 + $0xc8] sm:$0xff]
      %v361 = vld [vmem:[%s243 + $0xd0] sm:$0xff]
      %v362 = vld [vmem:[%s243 + $0xd8] sm:$0xff]
      %v363 = vld [vmem:[%s243 + $0xe0] sm:$0xff]
      %v364 = vld [vmem:[%s243 + $0xe8] sm:$0xff]
      %v365 = vld [vmem:[%s243 + $0xf0] sm:$0xff]
      %v366 = vld [vmem:[%s243 + $0xf8] sm:$0xff]
      %v367 = vld [vmem:[%s253] sm:$0xf]
      %v368 = vld [vmem:[%s253 + $0x4] sm:$0xf]
      %v369 = vld [vmem:[%s253 + $0x8] sm:$0xf]
      %v370 = vld [vmem:[%s253 + $0xc] sm:$0xf]
      %v371 = vld [vmem:[%s253 + $0x10] sm:$0xf]
      %v372 = vld [vmem:[%s253 + $0x14] sm:$0xf]
      %v373 = vld [vmem:[%s253 + $0x18] sm:$0xf]
      %v374 = vld [vmem:[%s253 + $0x1c] sm:$0xf]
      %v375 = vld [vmem:[%s253 + $0x20] sm:$0xf]
      %v376 = vld [vmem:[%s253 + $0x24] sm:$0xf]
      %v377 = vld [vmem:[%s253 + $0x28] sm:$0xf]
      %v378 = vld [vmem:[%s253 + $0x2c] sm:$0xf]
      %v379 = vld [vmem:[%s253 + $0x30] sm:$0xf]
      %v380 = vld [vmem:[%s253 + $0x34] sm:$0xf]
      %v381 = vld [vmem:[%s253 + $0x38] sm:$0xf]
      %v382 = vld [vmem:[%s253 + $0x3c] sm:$0xf]
      %v383 = vld [vmem:[%s253 + $0x40] sm:$0xf]
      %v384 = vld [vmem:[%s253 + $0x44] sm:$0xf]
      %v385 = vld [vmem:[%s253 + $0x48] sm:$0xf]
      %v386 = vld [vmem:[%s253 + $0x4c] sm:$0xf]
      %v387 = vld [vmem:[%s253 + $0x50] sm:$0xf]
      %v388 = vld [vmem:[%s253 + $0x54] sm:$0xf]
      %v389 = vld [vmem:[%s253 + $0x58] sm:$0xf]
      %v390 = vld [vmem:[%s253 + $0x5c] sm:$0xf]
      %v391 = vld [vmem:[%s253 + $0x60] sm:$0xf]
      %v392 = vld [vmem:[%s253 + $0x64] sm:$0xf]
      %v393 = vld [vmem:[%s253 + $0x68] sm:$0xf]
      %v394 = vld [vmem:[%s253 + $0x6c] sm:$0xf]
      %v395 = vld [vmem:[%s253 + $0x70] sm:$0xf]
      %v396 = vld [vmem:[%s253 + $0x74] sm:$0xf]
      %v397 = vld [vmem:[%s253 + $0x78] sm:$0xf]
      %v398 = vld [vmem:[%s253 + $0x7c] sm:$0xf]
      %v431 = vunpack.c.l.b16 %v335
      %v432 = vunpack.c.h.b16 %v335
      %v433 = vunpack.c.l.b16 %v336
      %v434 = vunpack.c.h.b16 %v336
      %v435 = vunpack.c.l.b16 %v337
      %v436 = vunpack.c.h.b16 %v337
      %v437 = vunpack.c.l.b16 %v338
      %v438 = vunpack.c.h.b16 %v338
      %v439 = vunpack.c.l.b16 %v339
      %v440 = vunpack.c.h.b16 %v339
      %v441 = vunpack.c.l.b16 %v340
      %v442 = vunpack.c.h.b16 %v340
      %v443 = vunpack.c.l.b16 %v341
      %v444 = vunpack.c.h.b16 %v341
      %v445 = vunpack.c.l.b16 %v342
      %v446 = vunpack.c.h.b16 %v342
      %v447 = vunpack.c.l.b16 %v343
      %v448 = vunpack.c.h.b16 %v343
      %v449 = vunpack.c.l.b16 %v344
      %v450 = vunpack.c.h.b16 %v344
      %v451 = vunpack.c.l.b16 %v345
      %v452 = vunpack.c.h.b16 %v345
      %v453 = vunpack.c.l.b16 %v346
      %v454 = vunpack.c.h.b16 %v346
      %v455 = vunpack.c.l.b16 %v347
      %v456 = vunpack.c.h.b16 %v347
      %v457 = vunpack.c.l.b16 %v348
      %v458 = vunpack.c.h.b16 %v348
      %v459 = vunpack.c.l.b16 %v349
      %v460 = vunpack.c.h.b16 %v349
      %v461 = vunpack.c.l.b16 %v350
      %v462 = vunpack.c.h.b16 %v350
      %v463 = vunpack.c.l.b16 %v351
      %v464 = vunpack.c.h.b16 %v351
      %v465 = vunpack.c.l.b16 %v352
      %v466 = vunpack.c.h.b16 %v352
      %v467 = vunpack.c.l.b16 %v353
      %v468 = vunpack.c.h.b16 %v353
      %v469 = vunpack.c.l.b16 %v354
      %v470 = vunpack.c.h.b16 %v354
      %v471 = vunpack.c.l.b16 %v355
      %v472 = vunpack.c.h.b16 %v355
      %v473 = vunpack.c.l.b16 %v356
      %v474 = vunpack.c.h.b16 %v356
      %v475 = vunpack.c.l.b16 %v357
      %v476 = vunpack.c.h.b16 %v357
      %v477 = vunpack.c.l.b16 %v358
      %v478 = vunpack.c.h.b16 %v358
      %v479 = vunpack.c.l.b16 %v359
      %v480 = vunpack.c.h.b16 %v359
      %v481 = vunpack.c.l.b16 %v360
      %v482 = vunpack.c.h.b16 %v360
      %v483 = vunpack.c.l.b16 %v361
      %v484 = vunpack.c.h.b16 %v361
      %v485 = vunpack.c.l.b16 %v362
      %v486 = vunpack.c.h.b16 %v362
      %v487 = vunpack.c.l.b16 %v363
      %v488 = vunpack.c.h.b16 %v363
      %v489 = vunpack.c.l.b16 %v364
      %v490 = vunpack.c.h.b16 %v364
      %v491 = vunpack.c.l.b16 %v365
      %v492 = vunpack.c.h.b16 %v365
      %v493 = vunpack.c.l.b16 %v366
      %v494 = vunpack.c.h.b16 %v366
      %v495 = vpack.c.b16 %v433, %v431
      %v496 = vpack.c.b16 %v434, %v432
      %v497 = vpack.c.b16 %v437, %v435
      %v498 = vpack.c.b16 %v438, %v436
      %v499 = vpack.c.b16 %v441, %v439
      %v500 = vpack.c.b16 %v442, %v440
      %v501 = vpack.c.b16 %v445, %v443
      %v502 = vpack.c.b16 %v446, %v444
      %v503 = vpack.c.b16 %v449, %v447
      %v504 = vpack.c.b16 %v450, %v448
      %v505 = vpack.c.b16 %v453, %v451
      %v506 = vpack.c.b16 %v454, %v452
      %v507 = vpack.c.b16 %v457, %v455
      %v508 = vpack.c.b16 %v458, %v456
      %v509 = vpack.c.b16 %v461, %v459
      %v510 = vpack.c.b16 %v462, %v460
      %v511 = vpack.c.b16 %v465, %v463
      %v512 = vpack.c.b16 %v466, %v464
      %v513 = vpack.c.b16 %v469, %v467
      %v514 = vpack.c.b16 %v470, %v468
      %v515 = vpack.c.b16 %v473, %v471
      %v516 = vpack.c.b16 %v474, %v472
      %v517 = vpack.c.b16 %v477, %v475
      %v518 = vpack.c.b16 %v478, %v476
      %v519 = vpack.c.b16 %v481, %v479
      %v520 = vpack.c.b16 %v482, %v480
      %v521 = vpack.c.b16 %v485, %v483
      %v522 = vpack.c.b16 %v486, %v484
      %v523 = vpack.c.b16 %v489, %v487
      %v524 = vpack.c.b16 %v490, %v488
      %v525 = vpack.c.b16 %v493, %v491
      %v526 = vpack.c.b16 %v494, %v492
      %v591 = vunpack.c.l.b16 %v367
      %v592 = vunpack.c.l.b16 %v368
      %v593 = vunpack.c.l.b16 %v369
      %v594 = vunpack.c.l.b16 %v370
      %v595 = vunpack.c.l.b16 %v371
      %v596 = vunpack.c.l.b16 %v372
      %v597 = vunpack.c.l.b16 %v373
      %v598 = vunpack.c.l.b16 %v374
      %v599 = vunpack.c.l.b16 %v375
      %v600 = vunpack.c.l.b16 %v376
      %v601 = vunpack.c.l.b16 %v377
      %v602 = vunpack.c.l.b16 %v378
      %v603 = vunpack.c.l.b16 %v379
      %v604 = vunpack.c.l.b16 %v380
      %v605 = vunpack.c.l.b16 %v381
      %v606 = vunpack.c.l.b16 %v382
      %v607 = vunpack.c.l.b16 %v383
      %v608 = vunpack.c.l.b16 %v384
      %v609 = vunpack.c.l.b16 %v385
      %v610 = vunpack.c.l.b16 %v386
      %v611 = vunpack.c.l.b16 %v387
      %v612 = vunpack.c.l.b16 %v388
      %v613 = vunpack.c.l.b16 %v389
      %v614 = vunpack.c.l.b16 %v390
      %v615 = vunpack.c.l.b16 %v391
      %v616 = vunpack.c.l.b16 %v392
      %v617 = vunpack.c.l.b16 %v393
      %v618 = vunpack.c.l.b16 %v394
      %v619 = vunpack.c.l.b16 %v395
      %v620 = vunpack.c.l.b16 %v396
      %v621 = vunpack.c.l.b16 %v397
      %v622 = vunpack.c.l.b16 %v398
      %v623 = vpack.c.b16 %v592, %v591
      %v624 = vpack.c.b16 %v594, %v593
      %v625 = vpack.c.b16 %v596, %v595
      %v626 = vpack.c.b16 %v598, %v597
      %v627 = vpack.c.b16 %v600, %v599
      %v628 = vpack.c.b16 %v602, %v601
      %v629 = vpack.c.b16 %v604, %v603
      %v630 = vpack.c.b16 %v606, %v605
      %v631 = vpack.c.b16 %v608, %v607
      %v632 = vpack.c.b16 %v610, %v609
      %v633 = vpack.c.b16 %v612, %v611
      %v634 = vpack.c.b16 %v614, %v613
      %v635 = vpack.c.b16 %v616, %v615
      %v636 = vpack.c.b16 %v618, %v617
      %v637 = vpack.c.b16 %v620, %v619
      %v638 = vpack.c.b16 %v622, %v621
      %655 = vmatpush.bf16.msra.mxu0 %v630
      %656 = vmatpush.bf16.msra.mxu0 %v629
      %657 = vmatpush.bf16.msra.mxu0 %v628
      %658 = vmatpush.bf16.msra.mxu0 %v627
      %659 = vmatpush.bf16.msra.mxu0 %v626
      %660 = vmatpush.bf16.msra.mxu0 %v625
      %661 = vmatpush.bf16.msra.mxu0 %v624
      %662 = vmatpush.bf16.msra.mxu0 %v623
      %663 = vmatmul.bf16.gmra.mxu0 %v495
      %v664 = vpop.f32.mrf.mxu0
      %v665 = vadd.f32 0.0, %v664
      %v666 = vpop.f32.mrf.mxu0
      %v667 = vadd.f32 0.0, %v666
      %668 = vmatmul.bf16.gmra.mxu0 %v497
      %v669 = vpop.f32.mrf.mxu0
      %v670 = vadd.f32 0.0, %v669
      %v671 = vpop.f32.mrf.mxu0
      %v672 = vadd.f32 0.0, %v671
      %673 = vmatmul.bf16.gmra.mxu0 %v499
      %v674 = vpop.f32.mrf.mxu0
      %v675 = vadd.f32 0.0, %v674
      %v676 = vpop.f32.mrf.mxu0
      %v677 = vadd.f32 0.0, %v676
      %678 = vmatmul.bf16.gmra.mxu0 %v501
      %v679 = vpop.f32.mrf.mxu0
      %v680 = vadd.f32 0.0, %v679
      %v681 = vpop.f32.mrf.mxu0
      %v682 = vadd.f32 0.0, %v681
      %683 = vmatmul.bf16.gmra.mxu0 %v503
      %v684 = vpop.f32.mrf.mxu0
      %v685 = vadd.f32 0.0, %v684
      %v686 = vpop.f32.mrf.mxu0
      %v687 = vadd.f32 0.0, %v686
      %688 = vmatmul.bf16.gmra.mxu0 %v505
      %v689 = vpop.f32.mrf.mxu0
      %v690 = vadd.f32 0.0, %v689
      %v691 = vpop.f32.mrf.mxu0
      %v692 = vadd.f32 0.0, %v691
      %693 = vmatmul.bf16.gmra.mxu0 %v507
      %v694 = vpop.f32.mrf.mxu0
      %v695 = vadd.f32 0.0, %v694
      %v696 = vpop.f32.mrf.mxu0
      %v697 = vadd.f32 0.0, %v696
      %698 = vmatmul.bf16.gmra.mxu0 %v509
      %v699 = vpop.f32.mrf.mxu0
      %v700 = vadd.f32 0.0, %v699
      %v701 = vpop.f32.mrf.mxu0
      %v702 = vadd.f32 0.0, %v701
      %703 = vmatmul.bf16.gmra.mxu0 %v511
      %v704 = vpop.f32.mrf.mxu0
      %v705 = vadd.f32 0.0, %v704
      %v706 = vpop.f32.mrf.mxu0
      %v707 = vadd.f32 0.0, %v706
      %708 = vmatmul.bf16.gmra.mxu0 %v513
      %v709 = vpop.f32.mrf.mxu0
      %v710 = vadd.f32 0.0, %v709
      %v711 = vpop.f32.mrf.mxu0
      %v712 = vadd.f32 0.0, %v711
      %713 = vmatmul.bf16.gmra.mxu0 %v515
      %v714 = vpop.f32.mrf.mxu0
      %v715 = vadd.f32 0.0, %v714
      %v716 = vpop.f32.mrf.mxu0
      %v717 = vadd.f32 0.0, %v716
      %718 = vmatmul.bf16.gmra.mxu0 %v517
      %v719 = vpop.f32.mrf.mxu0
      %v720 = vadd.f32 0.0, %v719
      %v721 = vpop.f32.mrf.mxu0
      %v722 = vadd.f32 0.0, %v721
      %723 = vmatmul.bf16.gmra.mxu0 %v519
      %v724 = vpop.f32.mrf.mxu0
      %v725 = vadd.f32 0.0, %v724
      %v726 = vpop.f32.mrf.mxu0
      %v727 = vadd.f32 0.0, %v726
      %728 = vmatmul.bf16.gmra.mxu0 %v521
      %v729 = vpop.f32.mrf.mxu0
      %v730 = vadd.f32 0.0, %v729
      %v731 = vpop.f32.mrf.mxu0
      %v732 = vadd.f32 0.0, %v731
      %733 = vmatmul.bf16.gmra.mxu0 %v523
      %v734 = vpop.f32.mrf.mxu0
      %v735 = vadd.f32 0.0, %v734
      %v736 = vpop.f32.mrf.mxu0
      %v737 = vadd.f32 0.0, %v736
      %738 = vmatmul.bf16.gmra.mxu0 %v525
      %v739 = vpop.f32.mrf.mxu0
      %v740 = vadd.f32 0.0, %v739
      %v741 = vpop.f32.mrf.mxu0
      %v742 = vadd.f32 0.0, %v741
      %743 = vdwg.mxu0
      %744 = vmatpush.bf16.msra.mxu0 %v638
      %745 = vmatpush.bf16.msra.mxu0 %v637
      %746 = vmatpush.bf16.msra.mxu0 %v636
      %747 = vmatpush.bf16.msra.mxu0 %v635
      %748 = vmatpush.bf16.msra.mxu0 %v634
      %749 = vmatpush.bf16.msra.mxu0 %v633
      %750 = vmatpush.bf16.msra.mxu0 %v632
      %751 = vmatpush.bf16.msra.mxu0 %v631
      %752 = vmatmul.bf16.gmra.mxu0 %v496
      %v753 = vpop.f32.mrf.mxu0
      %v754 = vadd.f32 %v665, %v753
      %v755 = vpop.f32.mrf.mxu0
      %v756 = vadd.f32 %v667, %v755
      %757 = vmatmul.bf16.gmra.mxu0 %v498
      %v758 = vpop.f32.mrf.mxu0
      %v759 = vadd.f32 %v670, %v758
      %v760 = vpop.f32.mrf.mxu0
      %v761 = vadd.f32 %v672, %v760
      %762 = vmatmul.bf16.gmra.mxu0 %v500
      %v763 = vpop.f32.mrf.mxu0
      %v764 = vadd.f32 %v675, %v763
      %v765 = vpop.f32.mrf.mxu0
      %v766 = vadd.f32 %v677, %v765
      %767 = vmatmul.bf16.gmra.mxu0 %v502
      %v768 = vpop.f32.mrf.mxu0
      %v769 = vadd.f32 %v680, %v768
      %v770 = vpop.f32.mrf.mxu0
      %v771 = vadd.f32 %v682, %v770
      %772 = vmatmul.bf16.gmra.mxu0 %v504
      %v773 = vpop.f32.mrf.mxu0
      %v774 = vadd.f32 %v685, %v773
      %v775 = vpop.f32.mrf.mxu0
      %v776 = vadd.f32 %v687, %v775
      %777 = vmatmul.bf16.gmra.mxu0 %v506
      %v778 = vpop.f32.mrf.mxu0
      %v779 = vadd.f32 %v690, %v778
      %v780 = vpop.f32.mrf.mxu0
      %v781 = vadd.f32 %v692, %v780
      %782 = vmatmul.bf16.gmra.mxu0 %v508
      %v783 = vpop.f32.mrf.mxu0
      %v784 = vadd.f32 %v695, %v783
      %v785 = vpop.f32.mrf.mxu0
      %v786 = vadd.f32 %v697, %v785
      %787 = vmatmul.bf16.gmra.mxu0 %v510
      %v788 = vpop.f32.mrf.mxu0
      %v789 = vadd.f32 %v700, %v788
      %v790 = vpop.f32.mrf.mxu0
      %v791 = vadd.f32 %v702, %v790
      %792 = vmatmul.bf16.gmra.mxu0 %v512
      %v793 = vpop.f32.mrf.mxu0
      %v794 = vadd.f32 %v705, %v793
      %v795 = vpop.f32.mrf.mxu0
      %v796 = vadd.f32 %v707, %v795
      %797 = vmatmul.bf16.gmra.mxu0 %v514
      %v798 = vpop.f32.mrf.mxu0
      %v799 = vadd.f32 %v710, %v798
      %v800 = vpop.f32.mrf.mxu0
      %v801 = vadd.f32 %v712, %v800
      %802 = vmatmul.bf16.gmra.mxu0 %v516
      %v803 = vpop.f32.mrf.mxu0
      %v804 = vadd.f32 %v715, %v803
      %v805 = vpop.f32.mrf.mxu0
      %v806 = vadd.f32 %v717, %v805
      %807 = vmatmul.bf16.gmra.mxu0 %v518
      %v808 = vpop.f32.mrf.mxu0
      %v809 = vadd.f32 %v720, %v808
      %v810 = vpop.f32.mrf.mxu0
      %v811 = vadd.f32 %v722, %v810
      %812 = vmatmul.bf16.gmra.mxu0 %v520
      %v813 = vpop.f32.mrf.mxu0
      %v814 = vadd.f32 %v725, %v813
      %v815 = vpop.f32.mrf.mxu0
      %v816 = vadd.f32 %v727, %v815
      %817 = vmatmul.bf16.gmra.mxu0 %v522
      %v818 = vpop.f32.mrf.mxu0
      %v819 = vadd.f32 %v730, %v818
      %v820 = vpop.f32.mrf.mxu0
      %v821 = vadd.f32 %v732, %v820
      %822 = vmatmul.bf16.gmra.mxu0 %v524
      %v823 = vpop.f32.mrf.mxu0
      %v824 = vadd.f32 %v735, %v823
      %v825 = vpop.f32.mrf.mxu0
      %v826 = vadd.f32 %v737, %v825
      %827 = vmatmul.bf16.gmra.mxu0 %v526
      %v828 = vpop.f32.mrf.mxu0
      %v829 = vadd.f32 %v740, %v828
      %v830 = vpop.f32.mrf.mxu0
      %v831 = vadd.f32 %v742, %v830
      %832 = vdwg.mxu0
      %v833 = vadd.f32 %v303, %v754
      %v834 = vadd.f32 %v304, %v756
      %v835 = vadd.f32 %v305, %v759
      %v836 = vadd.f32 %v306, %v761
      %v837 = vadd.f32 %v307, %v764
      %v838 = vadd.f32 %v308, %v766
      %v839 = vadd.f32 %v309, %v769
      %v840 = vadd.f32 %v310, %v771
      %v841 = vadd.f32 %v311, %v774
      %v842 = vadd.f32 %v312, %v776
      %v843 = vadd.f32 %v313, %v779
      %v844 = vadd.f32 %v314, %v781
      %v845 = vadd.f32 %v315, %v784
      %v846 = vadd.f32 %v316, %v786
      %v847 = vadd.f32 %v317, %v789
      %v848 = vadd.f32 %v318, %v791
      %v849 = vadd.f32 %v319, %v794
      %v850 = vadd.f32 %v320, %v796
      %v851 = vadd.f32 %v321, %v799
      %v852 = vadd.f32 %v322, %v801
      %v853 = vadd.f32 %v323, %v804
      %v854 = vadd.f32 %v324, %v806
      %v855 = vadd.f32 %v325, %v809
      %v856 = vadd.f32 %v326, %v811
      %v857 = vadd.f32 %v327, %v814
      %v858 = vadd.f32 %v328, %v816
      %v859 = vadd.f32 %v329, %v819
      %v860 = vadd.f32 %v330, %v821
      %v861 = vadd.f32 %v331, %v824
      %v862 = vadd.f32 %v332, %v826
      %v863 = vadd.f32 %v333, %v829
      %v864 = vadd.f32 %v334, %v831
      %865 = vst [vmem:[%s265] sm:$0xff] %v833
      %866 = vst [vmem:[%s265 + $0x8] sm:$0xff] %v834
      %867 = vst [vmem:[%s265 + $0x10] sm:$0xff] %v835
      %868 = vst [vmem:[%s265 + $0x18] sm:$0xff] %v836
      %869 = vst [vmem:[%s265 + $0x20] sm:$0xff] %v837
      %870 = vst [vmem:[%s265 + $0x28] sm:$0xff] %v838
      %871 = vst [vmem:[%s265 + $0x30] sm:$0xff] %v839
      %872 = vst [vmem:[%s265 + $0x38] sm:$0xff] %v840
      %873 = vst [vmem:[%s265 + $0x40] sm:$0xff] %v841
      %874 = vst [vmem:[%s265 + $0x48] sm:$0xff] %v842
      %875 = vst [vmem:[%s265 + $0x50] sm:$0xff] %v843
      %876 = vst [vmem:[%s265 + $0x58] sm:$0xff] %v844
      %877 = vst [vmem:[%s265 + $0x60] sm:$0xff] %v845
      %878 = vst [vmem:[%s265 + $0x68] sm:$0xff] %v846
      %879 = vst [vmem:[%s265 + $0x70] sm:$0xff] %v847
      %880 = vst [vmem:[%s265 + $0x78] sm:$0xff] %v848
      %881 = vst [vmem:[%s265 + $0x80] sm:$0xff] %v849
      %882 = vst [vmem:[%s265 + $0x88] sm:$0xff] %v850
      %883 = vst [vmem:[%s265 + $0x90] sm:$0xff] %v851
      %884 = vst [vmem:[%s265 + $0x98] sm:$0xff] %v852
      %885 = vst [vmem:[%s265 + $0xa0] sm:$0xff] %v853
      %886 = vst [vmem:[%s265 + $0xa8] sm:$0xff] %v854
      %887 = vst [vmem:[%s265 + $0xb0] sm:$0xff] %v855
      %888 = vst [vmem:[%s265 + $0xb8] sm:$0xff] %v856
      %889 = vst [vmem:[%s265 + $0xc0] sm:$0xff] %v857
      %890 = vst [vmem:[%s265 + $0xc8] sm:$0xff] %v858
      %891 = vst [vmem:[%s265 + $0xd0] sm:$0xff] %v859
      %892 = vst [vmem:[%s265 + $0xd8] sm:$0xff] %v860
      %893 = vst [vmem:[%s265 + $0xe0] sm:$0xff] %v861
      %894 = vst [vmem:[%s265 + $0xe8] sm:$0xff] %v862
      %895 = vst [vmem:[%s265 + $0xf0] sm:$0xff] %v863
      %896 = vst [vmem:[%s265 + $0xf8] sm:$0xff] %v864
      // Predicated region
      $region37: #{pl_matmul.1} parent=31 // pred_check
        %p897 = pneg %p267
      $region38: #{pl_matmul.1} parent=31 // pred_check_branch
        %899 = sbr.rel (%p897) target = $region40
      $region39: #{pl_matmul.1} parent=31 // pred_region
        %v900 = vld [vmem:[%s265] sm:$0xff]
        %v901 = vld [vmem:[%s265 + $0x8] sm:$0xff]
        %v902 = vld [vmem:[%s265 + $0x10] sm:$0xff]
        %v903 = vld [vmem:[%s265 + $0x18] sm:$0xff]
        %v904 = vld [vmem:[%s265 + $0x20] sm:$0xff]
        %v905 = vld [vmem:[%s265 + $0x28] sm:$0xff]
        %v906 = vld [vmem:[%s265 + $0x30] sm:$0xff]
        %v907 = vld [vmem:[%s265 + $0x38] sm:$0xff]
        %v908 = vld [vmem:[%s265 + $0x40] sm:$0xff]
        %v909 = vld [vmem:[%s265 + $0x48] sm:$0xff]
        %v910 = vld [vmem:[%s265 + $0x50] sm:$0xff]
        %v911 = vld [vmem:[%s265 + $0x58] sm:$0xff]
        %v912 = vld [vmem:[%s265 + $0x60] sm:$0xff]
        %v913 = vld [vmem:[%s265 + $0x68] sm:$0xff]
        %v914 = vld [vmem:[%s265 + $0x70] sm:$0xff]
        %v915 = vld [vmem:[%s265 + $0x78] sm:$0xff]
        %v916 = vld [vmem:[%s265 + $0x80] sm:$0xff]
        %v917 = vld [vmem:[%s265 + $0x88] sm:$0xff]
        %v918 = vld [vmem:[%s265 + $0x90] sm:$0xff]
        %v919 = vld [vmem:[%s265 + $0x98] sm:$0xff]
        %v920 = vld [vmem:[%s265 + $0xa0] sm:$0xff]
        %v921 = vld [vmem:[%s265 + $0xa8] sm:$0xff]
        %v922 = vld [vmem:[%s265 + $0xb0] sm:$0xff]
        %v923 = vld [vmem:[%s265 + $0xb8] sm:$0xff]
        %v924 = vld [vmem:[%s265 + $0xc0] sm:$0xff]
        %v925 = vld [vmem:[%s265 + $0xc8] sm:$0xff]
        %v926 = vld [vmem:[%s265 + $0xd0] sm:$0xff]
        %v927 = vld [vmem:[%s265 + $0xd8] sm:$0xff]
        %v928 = vld [vmem:[%s265 + $0xe0] sm:$0xff]
        %v929 = vld [vmem:[%s265 + $0xe8] sm:$0xff]
        %v930 = vld [vmem:[%s265 + $0xf0] sm:$0xff]
        %v931 = vld [vmem:[%s265 + $0xf8] sm:$0xff]
        %v932 = vld [vmem:[%s257] sm:$0x1]
        %v934 = vperm.slane %v932, 0
        %v936 = vadd.f32 %v900, %v934
        %v937 = vadd.f32 %v901, %v934
        %v938 = vadd.f32 %v902, %v934
        %v939 = vadd.f32 %v903, %v934
        %v940 = vadd.f32 %v904, %v934
        %v941 = vadd.f32 %v905, %v934
        %v942 = vadd.f32 %v906, %v934
        %v943 = vadd.f32 %v907, %v934
        %v944 = vadd.f32 %v908, %v934
        %v945 = vadd.f32 %v909, %v934
        %v946 = vadd.f32 %v910, %v934
        %v947 = vadd.f32 %v911, %v934
        %v948 = vadd.f32 %v912, %v934
        %v949 = vadd.f32 %v913, %v934
        %v950 = vadd.f32 %v914, %v934
        %v951 = vadd.f32 %v915, %v934
        %v952 = vadd.f32 %v916, %v934
        %v953 = vadd.f32 %v917, %v934
        %v954 = vadd.f32 %v918, %v934
        %v955 = vadd.f32 %v919, %v934
        %v956 = vadd.f32 %v920, %v934
        %v957 = vadd.f32 %v921, %v934
        %v958 = vadd.f32 %v922, %v934
        %v959 = vadd.f32 %v923, %v934
        %v960 = vadd.f32 %v924, %v934
        %v961 = vadd.f32 %v925, %v934
        %v962 = vadd.f32 %v926, %v934
        %v963 = vadd.f32 %v927, %v934
        %v964 = vadd.f32 %v928, %v934
        %v965 = vadd.f32 %v929, %v934
        %v966 = vadd.f32 %v930, %v934
        %v967 = vadd.f32 %v931, %v934
        %v968 = vmax.f32 %v936, 0.0
        %v969 = vmax.f32 %v937, 0.0
        %v970 = vmax.f32 %v938, 0.0
        %v971 = vmax.f32 %v939, 0.0
        %v972 = vmax.f32 %v940, 0.0
        %v973 = vmax.f32 %v941, 0.0
        %v974 = vmax.f32 %v942, 0.0
        %v975 = vmax.f32 %v943, 0.0
        %v976 = vmax.f32 %v944, 0.0
        %v977 = vmax.f32 %v945, 0.0
        %v978 = vmax.f32 %v946, 0.0
        %v979 = vmax.f32 %v947, 0.0
        %v980 = vmax.f32 %v948, 0.0
        %v981 = vmax.f32 %v949, 0.0
        %v982 = vmax.f32 %v950, 0.0
        %v983 = vmax.f32 %v951, 0.0
        %v984 = vmax.f32 %v952, 0.0
        %v985 = vmax.f32 %v953, 0.0
        %v986 = vmax.f32 %v954, 0.0
        %v987 = vmax.f32 %v955, 0.0
        %v988 = vmax.f32 %v956, 0.0
        %v989 = vmax.f32 %v957, 0.0
        %v990 = vmax.f32 %v958, 0.0
        %v991 = vmax.f32 %v959, 0.0
        %v992 = vmax.f32 %v960, 0.0
        %v993 = vmax.f32 %v961, 0.0
        %v994 = vmax.f32 %v962, 0.0
        %v995 = vmax.f32 %v963, 0.0
        %v996 = vmax.f32 %v964, 0.0
        %v997 = vmax.f32 %v965, 0.0
        %v998 = vmax.f32 %v966, 0.0
        %v999 = vmax.f32 %v967, 0.0
        %1000 = vst [vmem:[%s265] sm:$0xff] %v968
        %1001 = vst [vmem:[%s265 + $0x8] sm:$0xff] %v969
        %1002 = vst [vmem:[%s265 + $0x10] sm:$0xff] %v970
        %1003 = vst [vmem:[%s265 + $0x18] sm:$0xff] %v971
        %1004 = vst [vmem:[%s265 + $0x20] sm:$0xff] %v972
        %1005 = vst [vmem:[%s265 + $0x28] sm:$0xff] %v973
        %1006 = vst [vmem:[%s265 + $0x30] sm:$0xff] %v974
        %1007 = vst [vmem:[%s265 + $0x38] sm:$0xff] %v975
        %1008 = vst [vmem:[%s265 + $0x40] sm:$0xff] %v976
        %1009 = vst [vmem:[%s265 + $0x48] sm:$0xff] %v977
        %1010 = vst [vmem:[%s265 + $0x50] sm:$0xff] %v978
        %1011 = vst [vmem:[%s265 + $0x58] sm:$0xff] %v979
        %1012 = vst [vmem:[%s265 + $0x60] sm:$0xff] %v980
        %1013 = vst [vmem:[%s265 + $0x68] sm:$0xff] %v981
        %1014 = vst [vmem:[%s265 + $0x70] sm:$0xff] %v982
        %1015 = vst [vmem:[%s265 + $0x78] sm:$0xff] %v983
        %1016 = vst [vmem:[%s265 + $0x80] sm:$0xff] %v984
        %1017 = vst [vmem:[%s265 + $0x88] sm:$0xff] %v985
        %1018 = vst [vmem:[%s265 + $0x90] sm:$0xff] %v986
        %1019 = vst [vmem:[%s265 + $0x98] sm:$0xff] %v987
        %1020 = vst [vmem:[%s265 + $0xa0] sm:$0xff] %v988
        %1021 = vst [vmem:[%s265 + $0xa8] sm:$0xff] %v989
        %1022 = vst [vmem:[%s265 + $0xb0] sm:$0xff] %v990
        %1023 = vst [vmem:[%s265 + $0xb8] sm:$0xff] %v991
        %1024 = vst [vmem:[%s265 + $0xc0] sm:$0xff] %v992
        %1025 = vst [vmem:[%s265 + $0xc8] sm:$0xff] %v993
        %1026 = vst [vmem:[%s265 + $0xd0] sm:$0xff] %v994
        %1027 = vst [vmem:[%s265 + $0xd8] sm:$0xff] %v995
        %1028 = vst [vmem:[%s265 + $0xe0] sm:$0xff] %v996
        %1029 = vst [vmem:[%s265 + $0xe8] sm:$0xff] %v997
        %1030 = vst [vmem:[%s265 + $0xf0] sm:$0xff] %v998
        %1031 = vst [vmem:[%s265 + $0xf8] sm:$0xff] %v999
      $region40: #{pl_matmul.1} parent=31 // pred_fallthru
        _
      %s1032 = smul.u32 32, %s19
      %p1033 = scmp.lt.s32.totalorder %s1032, 255
      %s1034 = scalar_select %p1033, %s1032, 255
      %p1035 = scmp.lt.s32.totalorder %s20, 0
      %s1036 = scalar_select %p1035, %s20, 0
      %s1037 = sadd.s32 %s1036, %s1034
      %s1038 = smul.addr %s1037, 8
      %s1039 = scalar_lea.vmem %s3, %s1038
      // Predicated region
      $region41: #{pl_matmul.1} parent=31 // pred_check
        %p1040 = pneg %p135
      $region42: #{pl_matmul.1} parent=31 // pred_check_branch
        %1042 = sbr.rel (%p1040) target = $region44
      $region43: #{pl_matmul.1} parent=31 // pred_region
        %s1043 = smul.u32 32, %s19
      $region44: #{pl_matmul.1} parent=31 // pred_fallthru
        _
    $region32: #{pl_matmul.1} parent=5 // pred_fallthru
      _
    %p1044 = scmp.le.s32.totalorder 2, %s9
    // Predicated region
    $region45: #{pl_matmul.1} parent=5 // pred_check
      %p1045 = pneg %p1044
    $region46: #{pl_matmul.1} parent=5 // pred_check_branch
      %1047 = sbr.rel (%p1045) target = $region48
    $region47: #{pl_matmul.1} parent=5 // pred_region
      %s1048 = ssub.s32 %s9, 2
      // Predicated region
      $region49: #{pl_matmul.1} parent=47 // pred_check
        %p1049 = pneg %p141
      $region50: #{pl_matmul.1} parent=47 // pred_check_branch
        %1051 = sbr.rel (%p1049) target = $region52
      $region51: #{pl_matmul.1} parent=47 // pred_region
        %s1052 = smul.u32 32, %s22
        %p1053 = scmp.lt.s32.totalorder %s1052, 255
        %s1054 = scalar_select %p1053, %s1052, 255
        %p1055 = scmp.lt.s32.totalorder %s23, 0
        %s1056 = scalar_select %p1055, %s23, 0
        %s1057 = sadd.s32 %s1056, %s1054
        %s1058 = smul.addr %s1057, 8
        %s1059 = scalar_lea.vmem %s3, %s1058
      $region52: #{pl_matmul.1} parent=47 // pred_fallthru
        _
    $region48: #{pl_matmul.1} parent=5 // pred_fallthru
      _
  $region6: #{pl_matmul.1} parent=0 // loop_footer
    %s13 = sadd.s32 1, %s9
  $region7: #{pl_matmul.1} parent=0 // loop_footer_branch
    %8 = sbr.rel target = $region3
  $region8: #{pl_matmul.1} parent=0 // loop_exit
    _

</llo_original>
